<compile_context>
chip_gen: v7x
topology: tpu7x:2x2x1
jax: 0.10.0
libtpu: 0.0.40
codegen_flags: <defaults>
</compile_context>

<pallas_src>
import math
from functools import partial

import jax
import jax.numpy as jnp
from jax.experimental import pallas as pl
from jax.experimental.pallas import tpu as pltpu

_TWO_PI = 2.0 * math.pi


def _sm_kernel(logw_ref, rf_ref, cf_ref, out_ref, *, Q, D):
    """One (tt x tz) tile: out = sum_q exp(log w_q - 0.5*r2_q) * cos(phase_q).

    rf_ref: (1, Q, tt, D+2)  row-side features  [sx_0..sx_{D-1}, cos(px), sin(px)]
    cf_ref: (1, Q, D+2, tz)  col-side features  [sz_0..sz_{D-1}, cos(pz), sin(pz)]
    """
    tt = out_ref.shape[1]
    tz = out_ref.shape[2]
    acc = jnp.zeros((tt, tz), jnp.float32)
    for q in range(Q):                       # Q small & static -> unrolled
        xq = rf_ref[0, q]                    # (tt, D+2)
        zq = cf_ref[0, q]                    # (D+2, tz)

        # ||(x - z)/l_q||^2 via D outer-difference FMAs (pure VPU, >= 0 always).
        r2 = jnp.zeros((tt, tz), jnp.float32)
        for d in range(D):
            diff = xq[:, d:d + 1] - zq[d:d + 1, :]
            r2 = r2 + diff * diff

        # cos(px - pz) = cos(px)cos(pz) + sin(px)sin(pz): two outer FMAs.
        cosphase = (xq[:, D:D + 1] * zq[D:D + 1, :]
                    + xq[:, D + 1:D + 2] * zq[D + 1:D + 2, :])

        # w_q folded into the exponent (exp on EUP, essentially a free slot).
        acc = acc + jnp.exp(logw_ref[q] - 0.5 * r2) * cosphase

    out_ref[0] = acc.astype(out_ref.dtype)   # single full-tile store


def _tile_size(dim, pref, align):
    """Pick a tile (full dim when small; aligned tile + padded extent when big)."""
    if dim <= pref:
        return dim, dim
    t = max(align, (pref // align) * align)
    padded = ((dim + t - 1) // t) * t
    return t, padded


def sm_forward(X, Z=None, *, lengthscale, w, omega, diag=False,
               tt_pref=256, tz_pref=256):
    """
    X, Z: (K, N, T, D) float32
    lengthscale: (Q, D) positive, w: (Q,) positive, omega: (Q, D)
    Returns (K, N, T, Tz) covariance, or (K, N, T) ones when diag=True.
    """
    K, N, T, D = X.shape
    if diag:
        # Matches the module's `X.new_ones(K, N, T)` diag path.
        return jnp.ones((K, N, T), X.dtype)

    self_cov = Z is None
    if self_cov:
        Z = X
    Tz = Z.shape[2]
    Q = w.shape[0]
    B = K * N
    F = D + 2

    inv_l = (1.0 / lengthscale).astype(jnp.float32)        # (Q, D)
    om = omega.astype(jnp.float32)                          # (Q, D)
    logw = jnp.log(w).astype(jnp.float32)                   # (Q,)

    def point_features(P):
        """(B, Tp, D) -> (B, Q, Tp, D+2): scaled coords + cos/sin phase."""
        s = jnp.einsum("btd,qd->bqtd", P, inv_l)             # scaled coords
        ph = _TWO_PI * jnp.einsum("btd,qd->bqt", P, om)      # 2*pi*omega.x
        return jnp.concatenate(
            [s, jnp.cos(ph)[..., None], jnp.sin(ph)[..., None]], axis=-1)

    xb = X.reshape(B, T, D).astype(jnp.float32)
    rf = point_features(xb)                                  # (B, Q, T, F)
    if self_cov:
        cf_src = rf                                          # reuse, no recompute
    else:
        zb = Z.reshape(B, Tz, D).astype(jnp.float32)
        cf_src = point_features(zb)                          # (B, Q, Tz, F)
    cf = jnp.swapaxes(cf_src, -1, -2)                        # (B, Q, F, Tz)

    # Tiling: sublane-aligned T tiles, lane-dense (multiple-of-128) Tz tiles.
    tt, Tp = _tile_size(T, tt_pref, 8)
    tz, Tzp = _tile_size(Tz, tz_pref, 128)
    if Tp != T:
        rf = jnp.pad(rf, ((0, 0), (0, 0), (0, Tp - T), (0, 0)))
    if Tzp != Tz:
        cf = jnp.pad(cf, ((0, 0), (0, 0), (0, 0), (0, Tzp - Tz)))

    grid = (B, Tp // tt, Tzp // tz)
    out = pl.pallas_call(
        partial(_sm_kernel, Q=Q, D=D),
        out_shape=jax.ShapeDtypeStruct((B, Tp, Tzp), jnp.float32),
        grid=grid,
        in_specs=[
            pl.BlockSpec(memory_space=pltpu.MemorySpace.SMEM),            # log w (Q,)
            pl.BlockSpec((1, Q, tt, F), lambda b, i, j: (b, 0, i, 0)),    # row feats
            pl.BlockSpec((1, Q, F, tz), lambda b, i, j: (b, 0, 0, j)),    # col feats
        ],
        out_specs=pl.BlockSpec((1, tt, tz), lambda b, i, j: (b, i, j)),
        compiler_params=pltpu.CompilerParams(
            dimension_semantics=("parallel", "parallel", "parallel")),
    )(logw, rf, cf)

    out = out[:, :T, :Tz]
    return out.reshape(K, N, T, Tz)


def sm_reference(X, Z, lengthscale, w, omega):
    """Pure-JAX reference with the PyTorch module's formulation (X2-2XZ+Z2 + clamp)."""
    if Z is None:
        Z = X
    inv_l = 1.0 / lengthscale                     # (Q, D)
    sX = X[..., None, :] * inv_l                  # (K, N, T, Q, D)
    sZ = Z[..., None, :] * inv_l
    X2 = jnp.sum(sX ** 2, -1)                     # (K, N, T, Q)
    Z2 = jnp.sum(sZ ** 2, -1)
    XZ = jnp.einsum("kntqd,knsqd->kntsq", sX, sZ)
    r2 = jnp.clip(X2[:, :, :, None, :] - 2.0 * XZ + Z2[:, :, None, :, :], 0.0)
    pX = jnp.einsum("kntd,qd->kntq", X, omega)
    pZ = jnp.einsum("knsd,qd->knsq", Z, omega)
    phase = _TWO_PI * (pX[:, :, :, None, :] - pZ[:, :, None, :, :])
    return jnp.sum(w * jnp.exp(-0.5 * r2) * jnp.cos(phase), -1)


if __name__ == "__main__":
    key = jax.random.PRNGKey(0)
    kx, kz, kl, kw, ko = jax.random.split(key, 5)

    # --- test 1: small cross-covariance (single untiled block per batch) ----
    K, N, T, D, Q = 2, 4, 16, 3, 2
    X = jax.random.normal(kx, (K, N, T, D), dtype=jnp.float32)
    Z = jax.random.normal(kz, (K, N, T, D), dtype=jnp.float32)
    lengthscale = jnp.exp(0.3 * jax.random.normal(kl, (Q, D), dtype=jnp.float32))
    w = jnp.exp(0.2 * jax.random.normal(kw, (Q,), dtype=jnp.float32))
    omega = 0.5 * jax.random.normal(ko, (Q, D), dtype=jnp.float32)

    out = jax.block_until_ready(
        sm_forward(X, Z, lengthscale=lengthscale, w=w, omega=omega))
    ref = sm_reference(X, Z, lengthscale, w, omega)
    assert out.shape == (K, N, T, T), out.shape
    assert jnp.allclose(out, ref, rtol=1e-3, atol=2e-3), float(
        jnp.max(jnp.abs(out - ref)))

    # --- test 2: self-covariance (Z=None) path -------------------------------
    out_s = jax.block_until_ready(
        sm_forward(X, lengthscale=lengthscale, w=w, omega=omega))
    ref_s = sm_reference(X, None, lengthscale, w, omega)
    assert jnp.allclose(out_s, ref_s, rtol=1e-3, atol=2e-3), float(
        jnp.max(jnp.abs(out_s - ref_s)))

    # --- test 3: tiled + padded path (forces T/Tz tiling and padding) --------
    K2, N2, T2, Tz2 = 1, 2, 72, 200
    kx2, kz2 = jax.random.split(jax.random.PRNGKey(1), 2)
    X2 = jax.random.normal(kx2, (K2, N2, T2, D), dtype=jnp.float32)
    Z2 = jax.random.normal(kz2, (K2, N2, Tz2, D), dtype=jnp.float32)
    out2 = jax.block_until_ready(
        sm_forward(X2, Z2, lengthscale=lengthscale, w=w, omega=omega,
                   tt_pref=32, tz_pref=128))
    ref2 = sm_reference(X2, Z2, lengthscale, w, omega)
    assert out2.shape == (K2, N2, T2, Tz2), out2.shape
    assert jnp.allclose(out2, ref2, rtol=1e-3, atol=2e-3), float(
        jnp.max(jnp.abs(out2 - ref2)))

    # --- diag path (trivial, matches X.new_ones(K, N, T)) --------------------
    diag = sm_forward(X, diag=True, lengthscale=lengthscale, w=w, omega=omega)
    assert diag.shape == (K, N, T)

    print("KERNEL_OK")
</pallas_src>

<mosaic_0001>
module attributes {stable_mosaic.version = 11 : i64} {
  func.func @_sm_kernel(%arg0: i32, %arg1: i32, %arg2: i32, %arg3: memref<2xf32, #tpu.memory_space<smem>>, %arg4: memref<1x2x16x5xf32, #tpu.memory_space<vmem>>, %arg5: memref<1x2x5x16xf32, #tpu.memory_space<vmem>>, %arg6: memref<1x16x16xf32, #tpu.memory_space<vmem>>) attributes {dimension_semantics = [#tpu.dimension_semantics<parallel>, #tpu.dimension_semantics<parallel>, #tpu.dimension_semantics<parallel>], iteration_bounds = array<i64: 8, 1, 1>, scalar_prefetch = 0 : i64, scratch_operands = 0 : i64, tpu.core_type = #tpu.core_type<tc>, window_params = [{transform_indices = @transform_0, window_bounds = array<i64: 2>}, {transform_indices = @transform_1, window_bounds = array<i64: 1, 2, 16, 5>}, {transform_indices = @transform_2, window_bounds = array<i64: 1, 2, 5, 16>}, {transform_indices = @transform_3, window_bounds = array<i64: 1, 16, 16>}]} {
    %cst = arith.constant 0.000000e+00 : f32
    %0 = vector.broadcast %cst : f32 to vector<16x16xf32>
    %c0 = arith.constant 0 : index
    %c0_0 = arith.constant 0 : index
    %c0_1 = arith.constant 0 : index
    %c0_2 = arith.constant 0 : index
    %1 = vector.load %arg4[%c0, %c0_0, %c0_1, %c0_2] : memref<1x2x16x5xf32, #tpu.memory_space<vmem>>, vector<1x1x16x5xf32>
    %2 = vector.shape_cast %1 : vector<1x1x16x5xf32> to vector<16x5xf32>
    %c0_3 = arith.constant 0 : index
    %c0_4 = arith.constant 0 : index
    %c0_5 = arith.constant 0 : index
    %c0_6 = arith.constant 0 : index
    %3 = vector.load %arg5[%c0_3, %c0_4, %c0_5, %c0_6] : memref<1x2x5x16xf32, #tpu.memory_space<vmem>>, vector<1x1x5x16xf32>
    %4 = vector.shape_cast %3 : vector<1x1x5x16xf32> to vector<5x16xf32>
    %cst_7 = arith.constant 0.000000e+00 : f32
    %5 = vector.broadcast %cst_7 : f32 to vector<16x16xf32>
    %6 = vector.extract_strided_slice %2 {offsets = [0, 0], sizes = [16, 1], strides = [1, 1]} : vector<16x5xf32> to vector<16x1xf32>
    %7 = vector.extract_strided_slice %4 {offsets = [0, 0], sizes = [1, 16], strides = [1, 1]} : vector<5x16xf32> to vector<1x16xf32>
    %8 = vector.broadcast %6 : vector<16x1xf32> to vector<16x16xf32>
    %9 = vector.broadcast %7 : vector<1x16xf32> to vector<16x16xf32>
    %10 = arith.subf %8, %9 : vector<16x16xf32>
    %11 = arith.mulf %10, %10 : vector<16x16xf32>
    %12 = arith.addf %5, %11 : vector<16x16xf32>
    %13 = vector.extract_strided_slice %2 {offsets = [0, 1], sizes = [16, 1], strides = [1, 1]} : vector<16x5xf32> to vector<16x1xf32>
    %14 = vector.extract_strided_slice %4 {offsets = [1, 0], sizes = [1, 16], strides = [1, 1]} : vector<5x16xf32> to vector<1x16xf32>
    %15 = vector.broadcast %13 : vector<16x1xf32> to vector<16x16xf32>
    %16 = vector.broadcast %14 : vector<1x16xf32> to vector<16x16xf32>
    %17 = arith.subf %15, %16 : vector<16x16xf32>
    %18 = arith.mulf %17, %17 : vector<16x16xf32>
    %19 = arith.addf %12, %18 : vector<16x16xf32>
    %20 = vector.extract_strided_slice %2 {offsets = [0, 2], sizes = [16, 1], strides = [1, 1]} : vector<16x5xf32> to vector<16x1xf32>
    %21 = vector.extract_strided_slice %4 {offsets = [2, 0], sizes = [1, 16], strides = [1, 1]} : vector<5x16xf32> to vector<1x16xf32>
    %22 = vector.broadcast %20 : vector<16x1xf32> to vector<16x16xf32>
    %23 = vector.broadcast %21 : vector<1x16xf32> to vector<16x16xf32>
    %24 = arith.subf %22, %23 : vector<16x16xf32>
    %25 = arith.mulf %24, %24 : vector<16x16xf32>
    %26 = arith.addf %19, %25 : vector<16x16xf32>
    %27 = vector.extract_strided_slice %2 {offsets = [0, 3], sizes = [16, 1], strides = [1, 1]} : vector<16x5xf32> to vector<16x1xf32>
    %28 = vector.extract_strided_slice %4 {offsets = [3, 0], sizes = [1, 16], strides = [1, 1]} : vector<5x16xf32> to vector<1x16xf32>
    %29 = vector.broadcast %27 : vector<16x1xf32> to vector<16x16xf32>
    %30 = vector.broadcast %28 : vector<1x16xf32> to vector<16x16xf32>
    %31 = arith.mulf %29, %30 : vector<16x16xf32>
    %32 = vector.extract_strided_slice %2 {offsets = [0, 4], sizes = [16, 1], strides = [1, 1]} : vector<16x5xf32> to vector<16x1xf32>
    %33 = vector.extract_strided_slice %4 {offsets = [4, 0], sizes = [1, 16], strides = [1, 1]} : vector<5x16xf32> to vector<1x16xf32>
    %34 = vector.broadcast %32 : vector<16x1xf32> to vector<16x16xf32>
    %35 = vector.broadcast %33 : vector<1x16xf32> to vector<16x16xf32>
    %36 = arith.mulf %34, %35 : vector<16x16xf32>
    %37 = arith.addf %31, %36 : vector<16x16xf32>
    %c0_8 = arith.constant 0 : index
    %38 = memref.load %arg3[%c0_8] : memref<2xf32, #tpu.memory_space<smem>>
    %cst_9 = arith.constant 5.000000e-01 : f32
    %39 = vector.broadcast %cst_9 : f32 to vector<16x16xf32>
    %40 = arith.mulf %39, %26 : vector<16x16xf32>
    %41 = vector.broadcast %38 : f32 to vector<16x16xf32>
    %42 = arith.subf %41, %40 : vector<16x16xf32>
    %43 = math.exp %42 : vector<16x16xf32>
    %44 = arith.mulf %43, %37 : vector<16x16xf32>
    %45 = arith.addf %0, %44 : vector<16x16xf32>
    %c0_10 = arith.constant 0 : index
    %c1 = arith.constant 1 : index
    %c0_11 = arith.constant 0 : index
    %c0_12 = arith.constant 0 : index
    %46 = vector.load %arg4[%c0_10, %c1, %c0_11, %c0_12] : memref<1x2x16x5xf32, #tpu.memory_space<vmem>>, vector<1x1x16x5xf32>
    %47 = vector.shape_cast %46 : vector<1x1x16x5xf32> to vector<16x5xf32>
    %c0_13 = arith.constant 0 : index
    %c1_14 = arith.constant 1 : index
    %c0_15 = arith.constant 0 : index
    %c0_16 = arith.constant 0 : index
    %48 = vector.load %arg5[%c0_13, %c1_14, %c0_15, %c0_16] : memref<1x2x5x16xf32, #tpu.memory_space<vmem>>, vector<1x1x5x16xf32>
    %49 = vector.shape_cast %48 : vector<1x1x5x16xf32> to vector<5x16xf32>
    %cst_17 = arith.constant 0.000000e+00 : f32
    %50 = vector.broadcast %cst_17 : f32 to vector<16x16xf32>
    %51 = vector.extract_strided_slice %47 {offsets = [0, 0], sizes = [16, 1], strides = [1, 1]} : vector<16x5xf32> to vector<16x1xf32>
    %52 = vector.extract_strided_slice %49 {offsets = [0, 0], sizes = [1, 16], strides = [1, 1]} : vector<5x16xf32> to vector<1x16xf32>
    %53 = vector.broadcast %51 : vector<16x1xf32> to vector<16x16xf32>
    %54 = vector.broadcast %52 : vector<1x16xf32> to vector<16x16xf32>
    %55 = arith.subf %53, %54 : vector<16x16xf32>
    %56 = arith.mulf %55, %55 : vector<16x16xf32>
    %57 = arith.addf %50, %56 : vector<16x16xf32>
    %58 = vector.extract_strided_slice %47 {offsets = [0, 1], sizes = [16, 1], strides = [1, 1]} : vector<16x5xf32> to vector<16x1xf32>
    %59 = vector.extract_strided_slice %49 {offsets = [1, 0], sizes = [1, 16], strides = [1, 1]} : vector<5x16xf32> to vector<1x16xf32>
    %60 = vector.broadcast %58 : vector<16x1xf32> to vector<16x16xf32>
    %61 = vector.broadcast %59 : vector<1x16xf32> to vector<16x16xf32>
    %62 = arith.subf %60, %61 : vector<16x16xf32>
    %63 = arith.mulf %62, %62 : vector<16x16xf32>
    %64 = arith.addf %57, %63 : vector<16x16xf32>
    %65 = vector.extract_strided_slice %47 {offsets = [0, 2], sizes = [16, 1], strides = [1, 1]} : vector<16x5xf32> to vector<16x1xf32>
    %66 = vector.extract_strided_slice %49 {offsets = [2, 0], sizes = [1, 16], strides = [1, 1]} : vector<5x16xf32> to vector<1x16xf32>
    %67 = vector.broadcast %65 : vector<16x1xf32> to vector<16x16xf32>
    %68 = vector.broadcast %66 : vector<1x16xf32> to vector<16x16xf32>
    %69 = arith.subf %67, %68 : vector<16x16xf32>
    %70 = arith.mulf %69, %69 : vector<16x16xf32>
    %71 = arith.addf %64, %70 : vector<16x16xf32>
    %72 = vector.extract_strided_slice %47 {offsets = [0, 3], sizes = [16, 1], strides = [1, 1]} : vector<16x5xf32> to vector<16x1xf32>
    %73 = vector.extract_strided_slice %49 {offsets = [3, 0], sizes = [1, 16], strides = [1, 1]} : vector<5x16xf32> to vector<1x16xf32>
    %74 = vector.broadcast %72 : vector<16x1xf32> to vector<16x16xf32>
    %75 = vector.broadcast %73 : vector<1x16xf32> to vector<16x16xf32>
    %76 = arith.mulf %74, %75 : vector<16x16xf32>
    %77 = vector.extract_strided_slice %47 {offsets = [0, 4], sizes = [16, 1], strides = [1, 1]} : vector<16x5xf32> to vector<16x1xf32>
    %78 = vector.extract_strided_slice %49 {offsets = [4, 0], sizes = [1, 16], strides = [1, 1]} : vector<5x16xf32> to vector<1x16xf32>
    %79 = vector.broadcast %77 : vector<16x1xf32> to vector<16x16xf32>
    %80 = vector.broadcast %78 : vector<1x16xf32> to vector<16x16xf32>
    %81 = arith.mulf %79, %80 : vector<16x16xf32>
    %82 = arith.addf %76, %81 : vector<16x16xf32>
    %c1_18 = arith.constant 1 : index
    %83 = memref.load %arg3[%c1_18] : memref<2xf32, #tpu.memory_space<smem>>
    %cst_19 = arith.constant 5.000000e-01 : f32
    %84 = vector.broadcast %cst_19 : f32 to vector<16x16xf32>
    %85 = arith.mulf %84, %71 : vector<16x16xf32>
    %86 = vector.broadcast %83 : f32 to vector<16x16xf32>
    %87 = arith.subf %86, %85 : vector<16x16xf32>
    %88 = math.exp %87 : vector<16x16xf32>
    %89 = arith.mulf %88, %82 : vector<16x16xf32>
    %90 = arith.addf %45, %89 : vector<16x16xf32>
    %c0_20 = arith.constant 0 : index
    %c0_21 = arith.constant 0 : index
    %c0_22 = arith.constant 0 : index
    %91 = vector.load %arg6[%c0_20, %c0_21, %c0_22] : memref<1x16x16xf32, #tpu.memory_space<vmem>>, vector<1x16x16xf32>
    %92 = vector.shape_cast %91 : vector<1x16x16xf32> to vector<16x16xf32>
    %93 = vector.shape_cast %90 : vector<16x16xf32> to vector<1x16x16xf32>
    tpu.vector_store %arg6[%c0_20, %c0_21, %c0_22], %93 {strides = array<i32>} : memref<1x16x16xf32, #tpu.memory_space<vmem>>, vector<1x16x16xf32>,
    return
  }
  func.func @transform_0(%arg0: i32, %arg1: i32, %arg2: i32) -> i32 {
    %c0_i32 = arith.constant 0 : i32
    %c0_i32_0 = arith.constant 0 : i32
    return %c0_i32 : i32
  }
  func.func @transform_1(%arg0: i32, %arg1: i32, %arg2: i32) -> (i32, i32, i32, i32) {
    %c0_i32 = arith.constant 0 : i32
    %c0_i32_0 = arith.constant 0 : i32
    %c0_i32_1 = arith.constant 0 : i32
    return %arg0, %c0_i32, %arg1, %c0_i32_0 : i32, i32, i32, i32
  }
  func.func @transform_2(%arg0: i32, %arg1: i32, %arg2: i32) -> (i32, i32, i32, i32) {
    %c0_i32 = arith.constant 0 : i32
    %c0_i32_0 = arith.constant 0 : i32
    %c0_i32_1 = arith.constant 0 : i32
    return %arg0, %c0_i32, %c0_i32_0, %arg2 : i32, i32, i32, i32
  }
  func.func @transform_3(%arg0: i32, %arg1: i32, %arg2: i32) -> (i32, i32, i32) {
    %c0_i32 = arith.constant 0 : i32
    return %arg0, %arg1, %arg2 : i32, i32, i32
  }
}

</mosaic_0001>

<llo_original>
// kernel: tpu_custom_call.1
$region0: #{tpu_custom_call.1}
  #allocation0 [shape = 'u32[]', space=smem, size = 0x4, offset = 0x4, fixed_abs, tag = 'smem constant byte address 0x4 - core index']
  #allocation1 [shape = 'u32[144,128]{1,0:T(1,128)}', space=vmem, size = 0x12000, scoped, tag = 'internal scratch']
  %s0 = inlined_call_operand.vmem [shape: f32[2], index: 0, kind: input, shape index: {}]
  %s1 = inlined_call_operand.vmem [shape: f32[8,2,16,5], index: 1, kind: input, shape index: {}]
  %s2 = inlined_call_operand.vmem [shape: f32[8,2,5,16], index: 2, kind: input, shape index: {}]
  %s3 = inlined_call_operand.hbm [shape: f32[8,16,16], index: 3, kind: output, shape index: {}]
  %s4 = sld [smem:[#allocation0]]
  $region49: #{tpu_custom_call.1} parent=0
    _
  %s6 = ssub.s32 1, %s4
  %s7 = scalar_select 0, %s6, %s4
  $region1: #{tpu_custom_call.1} parent=0
    #allocation2 [shape = 'u8[512]{0}', space=smem, size = 0x200, scoped, tag = 'input window, operand 0, single buffered']
    #allocation3 [shape = 's32[2]{0}', space=sflag, size = 0x8, scoped, tag = 'scoped memory for tpu_custom_call.1']
    #allocation4 [shape = 's32[2]{0}', space=sflag, size = 0x8, scoped, tag = 'scoped memory for tpu_custom_call.1']
    #allocation5 [shape = 'u8[16384]{0}', space=vmem, size = 0x4000, scoped, tag = 'output window, operand 0']
    %8 = vsyncpa [#allocation4], 0
    %9 = vsyncpa [#allocation3], 0
    %s10 = scalar_lea.sflag [#allocation3], 1
    %11 = vsyncpa %s10, 0
    loop: start=0, step=1, limit=10
    $region2: #{tpu_custom_call.1} parent=1 // loop_pre_header
      _
    $region3: #{tpu_custom_call.1} parent=1 // loop_header
      %s13 = sphi 0, %s17
      %p14 = scmp.ge.s32.totalorder %s13, 10
      %s20 = sphi 0, %s39
      %s21 = sphi 0, %s35
      %s22 = sphi 0, %s31
      %s23 = sphi 0, %s20
      %s24 = sphi 0, %s21
      %s25 = sphi 0, %s22
      %s26 = sphi 0, %s23
      %s27 = sphi 0, %s24
      %s28 = sphi 0, %s25
      %s40 = sphi 0, %s40
      %s42 = sphi 0, %s40
      %s43 = sphi 0, %s42
      %s57 = sphi 0, %s43
      %s65 = sphi 0, %s67
      %s68 = sphi 0, %s65
      %s69 = sphi 0, %s68
      %s85 = sphi 0, %s69
      %s93 = sphi 0, %s95
      %s96 = sphi 0, %s93
      %s97 = sphi 0, %s96
      %s113 = sphi 0, %s97
      %s123 = sphi 0, %s125
      %s126 = sphi 0, %s123
      %s127 = sphi 0, %s126
      %s143 = sphi 0, %s127
    $region4: #{tpu_custom_call.1} parent=1 // loop_header_branch
      %16 = sbr.rel (%p14) target = $region8
    $region5: #{tpu_custom_call.1} parent=1 // loop_body
      %s18 = ssub.s32 %s13, 1
      %s19 = ssub.s32 %s13, 2
      %s29 = sadd.s32 1, %s22
      %p30 = scmp.ge.s32.totalorder %s29, 1
      %s31 = scalar_select %p30, 0, %s29
      %s32 = sadd.s32 1, %s21
      %s33 = scalar_select %p30, %s32, %s21
      %p34 = scmp.ge.s32.totalorder %s33, 1
      %s35 = scalar_select %p34, 0, %s33
      %s36 = sadd.s32 1, %s20
      %s37 = scalar_select %p34, %s36, %s20
      %p38 = scmp.ge.s32.totalorder %s37, 8
      %s39 = scalar_select %p38, 0, %s37
      %s41 = sadd.s32 %s40, 1
      %p44 = scmp.eq.s32.totalorder %s13, 7
      %p45 = scmp.ne.s32.totalorder %s40, %s42
      %p46 = scmp.eq.s32.totalorder %s13, 0
      %p47 = por %p45, %p46
      %p48 = scmp.ne.s32.totalorder %s40, %s42
      %p49 = scmp.eq.s32.totalorder %s18, 7
      %p50 = por %p48, %p49
      %p51 = scmp.ne.s32.totalorder %s42, %s43
      %p52 = scmp.eq.s32.totalorder %s18, 0
      %p53 = por %p51, %p52
      %p54 = scmp.ne.s32.totalorder %s42, %s43
      %p55 = scmp.eq.s32.totalorder %s19, 7
      %p56 = por %p54, %p55
      %p58 = scmp.ne.s32.totalorder %s43, %s57
      %p59 = scmp.eq.s32.totalorder %s19, 0
      %p60 = por %p58, %p59
      %s61 = ssub.s32 %s20, %s39
      %s62 = ssub.s32 %s21, %s35
      %s63 = sor.u32 %s61, %s62
      %p64 = scmp.eq.s32.totalorder %s63, 0
      %s66 = sadd.s32 %s65, 1
      %s67 = scalar_select %p64, %s65, %s66
      %p70 = pneg %p64
      %p71 = scmp.eq.s32.totalorder %s13, 7
      %p72 = por %p70, %p71
      %p73 = scmp.ne.s32.totalorder %s65, %s68
      %p74 = scmp.eq.s32.totalorder %s13, 0
      %p75 = por %p73, %p74
      %p76 = scmp.ne.s32.totalorder %s65, %s68
      %p77 = scmp.eq.s32.totalorder %s18, 7
      %p78 = por %p76, %p77
      %p79 = scmp.ne.s32.totalorder %s68, %s69
      %p80 = scmp.eq.s32.totalorder %s18, 0
      %p81 = por %p79, %p80
      %p82 = scmp.ne.s32.totalorder %s68, %s69
      %p83 = scmp.eq.s32.totalorder %s19, 7
      %p84 = por %p82, %p83
      %p86 = scmp.ne.s32.totalorder %s69, %s85
      %p87 = scmp.eq.s32.totalorder %s19, 0
      %p88 = por %p86, %p87
      %s89 = ssub.s32 %s20, %s39
      %s90 = ssub.s32 %s22, %s31
      %s91 = sor.u32 %s89, %s90
      %p92 = scmp.eq.s32.totalorder %s91, 0
      %s94 = sadd.s32 %s93, 1
      %s95 = scalar_select %p92, %s93, %s94
      %p98 = pneg %p92
      %p99 = scmp.eq.s32.totalorder %s13, 7
      %p100 = por %p98, %p99
      %p101 = scmp.ne.s32.totalorder %s93, %s96
      %p102 = scmp.eq.s32.totalorder %s13, 0
      %p103 = por %p101, %p102
      %p104 = scmp.ne.s32.totalorder %s93, %s96
      %p105 = scmp.eq.s32.totalorder %s18, 7
      %p106 = por %p104, %p105
      %p107 = scmp.ne.s32.totalorder %s96, %s97
      %p108 = scmp.eq.s32.totalorder %s18, 0
      %p109 = por %p107, %p108
      %p110 = scmp.ne.s32.totalorder %s96, %s97
      %p111 = scmp.eq.s32.totalorder %s19, 7
      %p112 = por %p110, %p111
      %p114 = scmp.ne.s32.totalorder %s97, %s113
      %p115 = scmp.eq.s32.totalorder %s19, 0
      %p116 = por %p114, %p115
      %s117 = ssub.s32 %s20, %s39
      %s118 = ssub.s32 %s21, %s35
      %s119 = sor.u32 %s117, %s118
      %s120 = ssub.s32 %s22, %s31
      %s121 = sor.u32 %s119, %s120
      %p122 = scmp.eq.s32.totalorder %s121, 0
      %s124 = sadd.s32 %s123, 1
      %s125 = scalar_select %p122, %s123, %s124
      %p128 = pneg %p122
      %p129 = scmp.eq.s32.totalorder %s13, 7
      %p130 = por %p128, %p129
      %p131 = scmp.ne.s32.totalorder %s123, %s126
      %p132 = scmp.eq.s32.totalorder %s13, 0
      %p133 = por %p131, %p132
      %p134 = scmp.ne.s32.totalorder %s123, %s126
      %p135 = scmp.eq.s32.totalorder %s18, 7
      %p136 = por %p134, %p135
      %p137 = scmp.ne.s32.totalorder %s126, %s127
      %p138 = scmp.eq.s32.totalorder %s18, 0
      %p139 = por %p137, %p138
      %p140 = scmp.ne.s32.totalorder %s126, %s127
      %p141 = scmp.eq.s32.totalorder %s19, 7
      %p142 = por %p140, %p141
      %p144 = scmp.ne.s32.totalorder %s127, %s143
      %p145 = scmp.eq.s32.totalorder %s19, 0
      %p146 = por %p144, %p145
      %p147 = scmp.le.s32.totalorder 1, %s13
      %p148 = scmp.lt.s32.totalorder %s13, 9
      %p149 = pnand %p147, %p148
      %p150 = pneg %p149
      // Predicated region
      $region9: #{tpu_custom_call.1} parent=5 // pred_check
        _
      $region10: #{tpu_custom_call.1} parent=5 // pred_check_branch
        %152 = sbr.rel (%p149) target = $region12
      $region11: #{tpu_custom_call.1} parent=5 // pred_region
        %s153 = ssub.s32 %s13, 1
        // Predicated region
        $region13: #{tpu_custom_call.1} parent=11 // pred_check
          %p154 = pneg %p53
        $region14: #{tpu_custom_call.1} parent=11 // pred_check_branch
          %156 = sbr.rel (%p154) target = $region16
        $region15: #{tpu_custom_call.1} parent=11 // pred_region
          %s158 = ssub.s32 16, 16
          %159 = vsyncadd [#allocation4], %s158
          %s161 = sshll.u32 %s0, 4
          %s162 = int_to_ptr.vmem [resolvable:$true] %s161
          %164 = dma.vmem_to_smem %s162, 16, [#allocation2], [#allocation4]
        $region16: #{tpu_custom_call.1} parent=11 // pred_fallthru
          _
      $region12: #{tpu_custom_call.1} parent=5 // pred_fallthru
        _
      %p165 = scmp.lt.s32.totalorder %s13, 8
      // Predicated region
      $region17: #{tpu_custom_call.1} parent=5 // pred_check
        %p166 = pneg %p165
      $region18: #{tpu_custom_call.1} parent=5 // pred_check_branch
        %168 = sbr.rel (%p166) target = $region20
      $region19: #{tpu_custom_call.1} parent=5 // pred_region
        // Predicated region
        $region21: #{tpu_custom_call.1} parent=19 // pred_check
          %p169 = pneg %p75
        $region22: #{tpu_custom_call.1} parent=19 // pred_check_branch
          %171 = sbr.rel (%p169) target = $region24
        $region23: #{tpu_custom_call.1} parent=19 // pred_region
          %s172 = smul.u32 2, %s21
          %p173 = scmp.lt.s32.totalorder %s20, 7
          %s174 = scalar_select %p173, %s20, 7
          %p175 = scmp.lt.s32.totalorder %s172, 1
          %s176 = scalar_select %p175, %s172, 1
          %s177 = smul.addr %s174, 4
          %s178 = sadd.s32 %s176, %s177
          %s179 = smul.addr %s178, 8
          %s180 = scalar_lea.vmem %s1, %s179
          %s181 = smul.u32 2, %s21
        $region24: #{tpu_custom_call.1} parent=19 // pred_fallthru
          _
        // Predicated region
        $region25: #{tpu_custom_call.1} parent=19 // pred_check
          %p182 = pneg %p103
        $region26: #{tpu_custom_call.1} parent=19 // pred_check_branch
          %184 = sbr.rel (%p182) target = $region28
        $region27: #{tpu_custom_call.1} parent=19 // pred_region
          %p185 = scmp.lt.s32.totalorder %s20, 7
          %s186 = scalar_select %p185, %s20, 7
          %p187 = scmp.lt.s32.totalorder %s22, 0
          %s188 = scalar_select %p187, %s22, 0
          %s189 = smul.addr %s186, 2
          %s190 = sadd.s32 %s188, %s189
          %s191 = smul.addr %s190, 8
          %s192 = scalar_lea.vmem %s2, %s191
        $region28: #{tpu_custom_call.1} parent=19 // pred_fallthru
          _
      $region20: #{tpu_custom_call.1} parent=5 // pred_fallthru
        _
      %p193 = scmp.le.s32.totalorder 1, %s13
      %p194 = scmp.lt.s32.totalorder %s13, 9
      %p195 = pnand %p193, %p194
      %p196 = pneg %p195
      // Predicated region
      $region29: #{tpu_custom_call.1} parent=5 // pred_check
        _
      $region30: #{tpu_custom_call.1} parent=5 // pred_check_branch
        %198 = sbr.rel (%p195) target = $region32
      $region31: #{tpu_custom_call.1} parent=5 // pred_region
        %s199 = ssub.s32 %s13, 1
        // Predicated region
        $region33: #{tpu_custom_call.1} parent=31 // pred_check
          %p200 = pneg %p53
        $region34: #{tpu_custom_call.1} parent=31 // pred_check_branch
          %202 = sbr.rel (%p200) target = $region36
        $region35: #{tpu_custom_call.1} parent=31 // pred_region
          %203 = dma.done [#allocation4], 16
        $region36: #{tpu_custom_call.1} parent=31 // pred_fallthru
          _
        %204 = sfence
        %p205 = pneg %p53
        %p206 = pneg %p50
        %s207 = smul.u32 2, %s24
        %p208 = scmp.lt.s32.totalorder %s23, 7
        %s209 = scalar_select %p208, %s23, 7
        %p210 = scmp.lt.s32.totalorder %s207, 1
        %s211 = scalar_select %p210, %s207, 1
        %s212 = smul.addr %s209, 4
        %s213 = sadd.s32 %s211, %s212
        %s214 = smul.addr %s213, 8
        %s215 = scalar_lea.vmem %s1, %s214
        %p216 = pneg %p81
        %p217 = pneg %p78
        %p218 = scmp.lt.s32.totalorder %s23, 7
        %s219 = scalar_select %p218, %s23, 7
        %p220 = scmp.lt.s32.totalorder %s25, 0
        %s221 = scalar_select %p220, %s25, 0
        %s222 = smul.addr %s219, 2
        %s223 = sadd.s32 %s221, %s222
        %s224 = smul.addr %s223, 8
        %s225 = scalar_lea.vmem %s2, %s224
        %p226 = pneg %p109
        %p227 = pneg %p106
        %p228 = pneg %p139
        %p229 = pneg %p136
        %s230 = sand.u32 %s126, 1
        %s231 = scalar_lea.sflag [#allocation3], %s230
        %s232 = sand.u32 %s126, 1
        %s233 = smul.addr %s232, 16
        %s234 = scalar_lea.vmem [#allocation5], %s233
        %s235 = smul.u32 2, %s24
        %p236 = scmp.lt.s32.totalorder %s23, 7
        %s237 = scalar_select %p236, %s23, 7
        %p238 = scmp.lt.s32.totalorder %s235, 1
        %s239 = scalar_select %p238, %s235, 1
        %s240 = smul.addr %s237, 4
        %s241 = sadd.s32 %s239, %s240
        %s242 = smul.addr %s241, 8
        %s243 = scalar_lea.vmem %s1, %s242
        %s244 = smul.u32 2, %s24
        %p245 = scmp.lt.s32.totalorder %s23, 7
        %s246 = scalar_select %p245, %s23, 7
        %p247 = scmp.lt.s32.totalorder %s25, 0
        %s248 = scalar_select %p247, %s25, 0
        %s249 = smul.addr %s246, 2
        %s250 = sadd.s32 %s248, %s249
        %s251 = smul.addr %s250, 8
        %s252 = scalar_lea.vmem %s2, %s251
        %s253 = smul.u32 2, %s24
        %v254 = vld [vmem:[%s243] sm:$0xff]
        %v255 = vld [vmem:[%s243 + $0x8] sm:$0xff]
        %v256 = vld [vmem:[%s252] sm:$0x1f]
        %258 = vset.pattern.permute.xlu0 0
        %259 = vperm.xlu0 %258, %v254
        %v260 = vpop.permute.xlu0 %259
        %263 = vset.pattern.permute.xlu0 0
        %264 = vperm.xlu0 %263, %v255
        %v265 = vpop.permute.xlu0 %264
        %v267 = vlaneseq
        %v268 = vshrl.u32 %v267, 7
        %v269 = vsub.s32 0, %v268
        %v270 = vrot.slane %v256, %v269
        %v271 = vsub.f32 %v260, %v270
        %v272 = vsub.f32 %v265, %v270
        %v273 = vmul.f32 %v271, %v271
        %v274 = vmul.f32 %v272, %v272
        %v275 = vadd.f32 %v273, 0.0
        %v276 = vadd.f32 %v274, 0.0
        %277 = vset.pattern.permute.xlu0 1
        %278 = vperm.xlu0 %277, %v254
        %v279 = vpop.permute.xlu0 %278
        %281 = vset.pattern.permute.xlu0 1
        %282 = vperm.xlu0 %281, %v255
        %v283 = vpop.permute.xlu0 %282
        %v285 = vlaneseq
        %v286 = vshrl.u32 %v285, 7
        %v287 = vsub.s32 1, %v286
        %v288 = vrot.slane %v256, %v287
        %v289 = vsub.f32 %v279, %v288
        %v290 = vsub.f32 %v283, %v288
        %v291 = vmul.f32 %v289, %v289
        %v292 = vmul.f32 %v290, %v290
        %v293 = vadd.f32 %v275, %v291
        %v294 = vadd.f32 %v276, %v292
        %295 = vset.pattern.permute.xlu0 2
        %296 = vperm.xlu0 %295, %v254
        %v297 = vpop.permute.xlu0 %296
        %299 = vset.pattern.permute.xlu0 2
        %300 = vperm.xlu0 %299, %v255
        %v301 = vpop.permute.xlu0 %300
        %v303 = vlaneseq
        %v304 = vshrl.u32 %v303, 7
        %v305 = vsub.s32 2, %v304
        %v306 = vrot.slane %v256, %v305
        %v307 = vsub.f32 %v297, %v306
        %v308 = vsub.f32 %v301, %v306
        %v309 = vmul.f32 %v307, %v307
        %v310 = vmul.f32 %v308, %v308
        %v311 = vadd.f32 %v293, %v309
        %v312 = vadd.f32 %v294, %v310
        %313 = vset.pattern.permute.xlu0 3
        %314 = vperm.xlu0 %313, %v254
        %v315 = vpop.permute.xlu0 %314
        %317 = vset.pattern.permute.xlu0 3
        %318 = vperm.xlu0 %317, %v255
        %v319 = vpop.permute.xlu0 %318
        %v321 = vlaneseq
        %v322 = vshrl.u32 %v321, 7
        %v323 = vsub.s32 3, %v322
        %v324 = vrot.slane %v256, %v323
        %v325 = vmul.f32 %v315, %v324
        %v326 = vmul.f32 %v319, %v324
        %327 = vset.pattern.permute.xlu0 4
        %328 = vperm.xlu0 %327, %v254
        %v329 = vpop.permute.xlu0 %328
        %331 = vset.pattern.permute.xlu0 4
        %332 = vperm.xlu0 %331, %v255
        %v333 = vpop.permute.xlu0 %332
        %v335 = vlaneseq
        %v336 = vshrl.u32 %v335, 7
        %v337 = vsub.s32 4, %v336
        %v338 = vrot.slane %v256, %v337
        %v339 = vmul.f32 %v329, %v338
        %v340 = vmul.f32 %v333, %v338
        %v341 = vadd.f32 %v325, %v339
        %v342 = vadd.f32 %v326, %v340
        %s343 = sld [smem:[#allocation2]]
        %v344 = vmul.f32 %v311, 0.5
        %v345 = vmul.f32 %v312, 0.5
        %v346 = vstv %s343
        %v347 = vsub.f32 %v346, %v344
        %v348 = vsub.f32 %v346, %v345
        %v349 = vmul.f32 %v347, 1.442695
        %v350 = vpow.pop %v349
        %v351 = vmul.f32 %v348, 1.442695
        %v352 = vpow.pop %v351
        %v353 = vmul.f32 %v350, %v341
        %v354 = vmul.f32 %v352, %v342
        %v355 = vadd.f32 %v353, 0.0
        %v356 = vadd.f32 %v354, 0.0
        %s357 = scalar_lea.vmem %s243, 16
        %v358 = vld [vmem:[%s357] sm:$0xff]
        %v359 = vld [vmem:[%s357 + $0x8] sm:$0xff]
        %s360 = scalar_lea.vmem %s252, 8
        %v361 = vld [vmem:[%s360] sm:$0x1f]
        %363 = vset.pattern.permute.xlu0 0
        %364 = vperm.xlu0 %363, %v358
        %v365 = vpop.permute.xlu0 %364
        %368 = vset.pattern.permute.xlu0 0
        %369 = vperm.xlu0 %368, %v359
        %v370 = vpop.permute.xlu0 %369
        %v372 = vlaneseq
        %v373 = vshrl.u32 %v372, 7
        %v374 = vsub.s32 0, %v373
        %v375 = vrot.slane %v361, %v374
        %v376 = vsub.f32 %v365, %v375
        %v377 = vsub.f32 %v370, %v375
        %v378 = vmul.f32 %v376, %v376
        %v379 = vmul.f32 %v377, %v377
        %v380 = vadd.f32 %v378, 0.0
        %v381 = vadd.f32 %v379, 0.0
        %382 = vset.pattern.permute.xlu0 1
        %383 = vperm.xlu0 %382, %v358
        %v384 = vpop.permute.xlu0 %383
        %386 = vset.pattern.permute.xlu0 1
        %387 = vperm.xlu0 %386, %v359
        %v388 = vpop.permute.xlu0 %387
        %v390 = vlaneseq
        %v391 = vshrl.u32 %v390, 7
        %v392 = vsub.s32 1, %v391
        %v393 = vrot.slane %v361, %v392
        %v394 = vsub.f32 %v384, %v393
        %v395 = vsub.f32 %v388, %v393
        %v396 = vmul.f32 %v394, %v394
        %v397 = vmul.f32 %v395, %v395
        %v398 = vadd.f32 %v380, %v396
        %v399 = vadd.f32 %v381, %v397
        %400 = vset.pattern.permute.xlu0 2
        %401 = vperm.xlu0 %400, %v358
        %v402 = vpop.permute.xlu0 %401
        %404 = vset.pattern.permute.xlu0 2
        %405 = vperm.xlu0 %404, %v359
        %v406 = vpop.permute.xlu0 %405
        %v408 = vlaneseq
        %v409 = vshrl.u32 %v408, 7
        %v410 = vsub.s32 2, %v409
        %v411 = vrot.slane %v361, %v410
        %v412 = vsub.f32 %v402, %v411
        %v413 = vsub.f32 %v406, %v411
        %v414 = vmul.f32 %v412, %v412
        %v415 = vmul.f32 %v413, %v413
        %v416 = vadd.f32 %v398, %v414
        %v417 = vadd.f32 %v399, %v415
        %418 = vset.pattern.permute.xlu0 3
        %419 = vperm.xlu0 %418, %v358
        %v420 = vpop.permute.xlu0 %419
        %422 = vset.pattern.permute.xlu0 3
        %423 = vperm.xlu0 %422, %v359
        %v424 = vpop.permute.xlu0 %423
        %v426 = vlaneseq
        %v427 = vshrl.u32 %v426, 7
        %v428 = vsub.s32 3, %v427
        %v429 = vrot.slane %v361, %v428
        %v430 = vmul.f32 %v420, %v429
        %v431 = vmul.f32 %v424, %v429
        %432 = vset.pattern.permute.xlu0 4
        %433 = vperm.xlu0 %432, %v358
        %v434 = vpop.permute.xlu0 %433
        %436 = vset.pattern.permute.xlu0 4
        %437 = vperm.xlu0 %436, %v359
        %v438 = vpop.permute.xlu0 %437
        %v440 = vlaneseq
        %v441 = vshrl.u32 %v440, 7
        %v442 = vsub.s32 4, %v441
        %v443 = vrot.slane %v361, %v442
        %v444 = vmul.f32 %v434, %v443
        %v445 = vmul.f32 %v438, %v443
        %v446 = vadd.f32 %v430, %v444
        %v447 = vadd.f32 %v431, %v445
        %s448 = sld [smem:[#allocation2 + $0x1]]
        %v449 = vmul.f32 %v416, 0.5
        %v450 = vmul.f32 %v417, 0.5
        %v451 = vstv %s448
        %v452 = vsub.f32 %v451, %v449
        %v453 = vsub.f32 %v451, %v450
        %v454 = vmul.f32 %v452, 1.442695
        %v455 = vpow.pop %v454
        %v456 = vmul.f32 %v453, 1.442695
        %v457 = vpow.pop %v456
        %v458 = vmul.f32 %v455, %v446
        %v459 = vmul.f32 %v457, %v447
        %v460 = vadd.f32 %v355, %v458
        %v461 = vadd.f32 %v356, %v459
        %vm462 = vcmask 130048
        %463 = vst.msk [vmem:[%s234] sm:$0xff] %vm462, %v460
        %464 = vst.msk [vmem:[%s234 + $0x8] sm:$0xff] %vm462, %v461
        %s465 = sand.u32 %s126, 1
        %s466 = scalar_lea.sflag [#allocation3], %s465
        %s467 = sand.u32 %s126, 1
        %s468 = smul.addr %s467, 16
        %s469 = scalar_lea.vmem [#allocation5], %s468
        // Predicated region
        $region37: #{tpu_custom_call.1} parent=31 // pred_check
          %p470 = pneg %p136
        $region38: #{tpu_custom_call.1} parent=31 // pred_check_branch
          %472 = sbr.rel (%p470) target = $region40
        $region39: #{tpu_custom_call.1} parent=31 // pred_region
          %s473 = smul.u32 2, %s24
          %s475 = ssub.s32 256, 256
          %476 = vsyncadd %s466, %s475
          %s477 = sadd.s32 %s25, %s473
          %s478 = smul.addr %s23, 2
          %s479 = sadd.s32 %s477, %s478
          %s480 = smul.addr %s479, 128
          %s481 = scalar_lea.hbm %s3, %s480
          %s482 = sshll.u32 %s469, 4
          %s483 = int_to_ptr.vmem [resolvable:$true] %s482
          %488 = dma.vmem_to_hbm [thread:$0]  %s483, 256, %s481, %s466, 128, 128, 8
        $region40: #{tpu_custom_call.1} parent=31 // pred_fallthru
          _
      $region32: #{tpu_custom_call.1} parent=5 // pred_fallthru
        _
      %p489 = scmp.le.s32.totalorder 2, %s13
      // Predicated region
      $region41: #{tpu_custom_call.1} parent=5 // pred_check
        %p490 = pneg %p489
      $region42: #{tpu_custom_call.1} parent=5 // pred_check_branch
        %492 = sbr.rel (%p490) target = $region44
      $region43: #{tpu_custom_call.1} parent=5 // pred_region
        %s493 = ssub.s32 %s13, 2
        // Predicated region
        $region45: #{tpu_custom_call.1} parent=43 // pred_check
          %p494 = pneg %p142
        $region46: #{tpu_custom_call.1} parent=43 // pred_check_branch
          %496 = sbr.rel (%p494) target = $region48
        $region47: #{tpu_custom_call.1} parent=43 // pred_region
          %s497 = sand.u32 %s127, 1
          %s498 = scalar_lea.sflag [#allocation3], %s497
          %s499 = sand.u32 %s127, 1
          %s500 = smul.addr %s499, 16
          %s501 = scalar_lea.vmem [#allocation5], %s500
          %502 = dma.done %s498, 256
        $region48: #{tpu_custom_call.1} parent=43 // pred_fallthru
          _
      $region44: #{tpu_custom_call.1} parent=5 // pred_fallthru
        _
    $region6: #{tpu_custom_call.1} parent=1 // loop_footer
      %s17 = sadd.s32 1, %s13
    $region7: #{tpu_custom_call.1} parent=1 // loop_footer_branch
      %12 = sbr.rel target = $region3
    $region8: #{tpu_custom_call.1} parent=1 // loop_exit
      _
    %503 = vsyncpa [#allocation3], 1
    %s504 = scalar_lea.sflag [#allocation3], 1
    %505 = vsyncpa %s504, 1
    %506 = vsyncpa [#allocation4], 1
    %s507 = scalar_lea.sflag [#allocation4], 1
    %508 = vsyncpa %s507, 1

</llo_original>
